<compile_context>
chip_gen: v7x
topology: tpu7x:2x2x1
jax: 0.10.0
libtpu: 0.0.40
codegen_flags: <defaults>
</compile_context>

<pallas_src>
import functools
import math

import jax
import jax.numpy as jnp
from jax.experimental import pallas as pl
from jax.experimental.pallas import tpu as pltpu

_LANE = 128
_TILE_ROWS = 4096  # (4096, 128) f32 block = 2 MiB, HBM-contiguous, v5e-safe


def _cosine_cutoff_kernel(x_ref, o_ref, *, cutoff):
    x = x_ref[...]
    dt = x.dtype
    ang = x * jnp.array(math.pi / cutoff, dt)
    c = jnp.array(0.5, dt) * (jnp.cos(ang) + jnp.array(1.0, dt))
    # Match reference semantics exactly: c * (d < cutoff).float()
    # (propagates NaN for NaN inputs, unlike jnp.where(..., 0)).
    mask = (x < jnp.array(cutoff, dt)).astype(dt)
    o_ref[...] = c * mask


def _choose_tile_rows(rows: int) -> int:
    """Pick a sublane-aligned tile so that big inputs get >= 2 grid steps."""
    if rows <= 8:
        return rows  # block == full extent (always legal)
    half = (rows + 1) // 2            # aim for at least 2 grid steps (v7x: 2 TCs)
    half8 = ((half + 7) // 8) * 8     # keep block rows a multiple of 8
    return min(_TILE_ROWS, half8)


def _run_aligned(x2d: jax.Array, cutoff: float) -> jax.Array:
    """Run the kernel on a (rows, 128) view. rows*128 elements, lane-aligned."""
    rows, lane = x2d.shape
    dtype = x2d.dtype
    n = rows * lane

    tile_rows = _choose_tile_rows(rows)
    grid = (pl.cdiv(rows, tile_rows),)

    kernel = functools.partial(_cosine_cutoff_kernel, cutoff=float(cutoff))
    itemsize = jnp.dtype(dtype).itemsize
    cost = pl.CostEstimate(
        flops=6 * n,              # scale, +1, *0.5, cmp, cast, mask-mul
        transcendentals=n,        # cos
        bytes_accessed=2 * n * itemsize,
    )

    return pl.pallas_call(
        kernel,
        out_shape=jax.ShapeDtypeStruct((rows, lane), dtype),
        grid_spec=pltpu.PrefetchScalarGridSpec(
            num_scalar_prefetch=0,
            grid=grid,
            in_specs=[pl.BlockSpec((tile_rows, lane), lambda i: (i, 0))],
            out_specs=pl.BlockSpec((tile_rows, lane), lambda i: (i, 0)),
        ),
        compiler_params=pltpu.CompilerParams(
            dimension_semantics=("parallel",),
        ),
        cost_estimate=cost,
    )(x2d)


def cosine_cutoff(distances: jax.Array, cutoff: float = 5.0) -> jax.Array:
    """Pallas TPU implementation of CosineCutoff.forward.

    Accepts any shape / float dtype; returns the same shape and dtype.
    """
    orig_shape = distances.shape
    dtype = distances.dtype
    n = distances.size
    if n == 0:
        return jnp.zeros(orig_shape, dtype)

    flat = distances.reshape(-1)  # free for a contiguous array

    if n % _LANE == 0:
        # Fast path: lane-aligned total -> free 2D view, no padding, no slicing.
        out2d = _run_aligned(flat.reshape(-1, _LANE), cutoff)
        return out2d.reshape(orig_shape)

    # Ragged total: pad the tail to the next lane multiple and reuse the fast
    # path.  For small inputs the pad is negligible.
    # TODO(synk): for very large non-128-aligned inputs, mask the ragged tail
    # in-kernel (manual DMA from a 1-D HBM ref + scalar-prefetched length)
    # instead of this pad + slice, which adds an extra HBM pass on each side.
    padded_n = pl.cdiv(n, _LANE) * _LANE
    flat_p = jnp.pad(flat, (0, padded_n - n))
    out2d = _run_aligned(flat_p.reshape(-1, _LANE), cutoff)
    return out2d.reshape(-1)[:n].reshape(orig_shape)


def _reference(distances, cutoff=5.0):
    c = 0.5 * (jnp.cos(distances * jnp.pi / cutoff) + 1.0)
    return c * (distances < cutoff).astype(distances.dtype)


if __name__ == "__main__":
    key = jax.random.PRNGKey(0)
    cutoff = 5.0

    # Small deterministic test shapes: pairwise/edge distances.
    #   (2, 64)   -> lane-aligned, rows=1  -> single full block
    #   (16, 256) -> lane-aligned, rows=32 -> 2 grid steps (tile_rows=16)
    #   (3, 50)   -> ragged total          -> pad-to-128 path + tail slice
    shapes = [(2, 64), (16, 256), (3, 50)]
    keys = jax.random.split(key, len(shapes))

    for k, shp in zip(keys, shapes):
        d = jax.random.uniform(k, shp, dtype=jnp.float32, minval=0.0, maxval=10.0)
        out = jax.block_until_ready(cosine_cutoff(d, cutoff=cutoff))
        ref = _reference(d, cutoff=cutoff)
        assert out.shape == d.shape, (out.shape, d.shape)
        assert out.dtype == d.dtype, (out.dtype, d.dtype)
        assert jnp.allclose(out, ref, atol=1e-6, rtol=1e-6), f"mismatch for shape {shp}"

    print("KERNEL_OK")
</pallas_src>

<mosaic_0001>
module attributes {stable_mosaic.version = 11 : i64} {
  func.func @_cosine_cutoff_kernel(%arg0: i32, %arg1: memref<1x128xf32, #tpu.memory_space<vmem>>, %arg2: memref<1x128xf32, #tpu.memory_space<vmem>>) attributes {dimension_semantics = [#tpu.dimension_semantics<parallel>], iteration_bounds = array<i64: 1>, scalar_prefetch = 0 : i64, scratch_operands = 0 : i64, tpu.core_type = #tpu.core_type<tc>, window_params = [{transform_indices = @transform_0, window_bounds = array<i64: 1, 128>}, {transform_indices = @transform_1, window_bounds = array<i64: 1, 128>}]} {
    %c0 = arith.constant 0 : index
    %c0_0 = arith.constant 0 : index
    %0 = vector.load %arg1[%c0, %c0_0] : memref<1x128xf32, #tpu.memory_space<vmem>>, vector<1x128xf32>
    %cst = arith.constant 0.628318548 : f32
    %1 = vector.broadcast %cst : f32 to vector<1x128xf32>
    %2 = arith.mulf %0, %1 : vector<1x128xf32>
    %3 = math.cos %2 : vector<1x128xf32>
    %cst_1 = arith.constant 1.000000e+00 : f32
    %4 = vector.broadcast %cst_1 : f32 to vector<1x128xf32>
    %5 = arith.addf %3, %4 : vector<1x128xf32>
    %cst_2 = arith.constant 5.000000e-01 : f32
    %6 = vector.broadcast %cst_2 : f32 to vector<1x128xf32>
    %7 = arith.mulf %6, %5 : vector<1x128xf32>
    %cst_3 = arith.constant 5.000000e+00 : f32
    %8 = vector.broadcast %cst_3 : f32 to vector<1x128xf32>
    %9 = arith.cmpf olt, %0, %8 : vector<1x128xf32>
    %10 = arith.extui %9 : vector<1x128xi1> to vector<1x128xi32>
    %11 = arith.sitofp %10 : vector<1x128xi32> to vector<1x128xf32>
    %12 = arith.mulf %7, %11 : vector<1x128xf32>
    %c0_4 = arith.constant 0 : index
    %c0_5 = arith.constant 0 : index
    %13 = vector.load %arg2[%c0_4, %c0_5] : memref<1x128xf32, #tpu.memory_space<vmem>>, vector<1x128xf32>
    tpu.vector_store %arg2[%c0_4, %c0_5], %12 {strides = array<i32>} : memref<1x128xf32, #tpu.memory_space<vmem>>, vector<1x128xf32>,
    return
  }
  func.func @transform_0(%arg0: i32) -> (i32, i32) {
    %c0_i32 = arith.constant 0 : i32
    %c0_i32_0 = arith.constant 0 : i32
    return %arg0, %c0_i32 : i32, i32
  }
  func.func @transform_1(%arg0: i32) -> (i32, i32) {
    %c0_i32 = arith.constant 0 : i32
    %c0_i32_0 = arith.constant 0 : i32
    return %arg0, %c0_i32 : i32, i32
  }
}

</mosaic_0001>

<llo_original>
// kernel: tpu_custom_call.1
$region0: #{tpu_custom_call.1}
  #allocation0 [shape = 'u32[]', space=smem, size = 0x4, offset = 0x4, fixed_abs, tag = 'smem constant byte address 0x4 - core index']
  #allocation1 [shape = 'u32[144,128]{1,0:T(1,128)}', space=vmem, size = 0x12000, scoped, tag = 'internal scratch']
  %s0 = inlined_call_operand.hbm [shape: f32[1,128], index: 0, kind: input, shape index: {}]
  %s1 = inlined_call_operand.hbm [shape: f32[1,128], index: 1, kind: output, shape index: {}]
  %s2 = sld [smem:[#allocation0]]
  $region18: #{tpu_custom_call.1} parent=0
    _
  %s4 = ssub.s32 1, %s2
  %s5 = scalar_select 0, %s4, %s2
  $region1: #{tpu_custom_call.1} parent=0
    #allocation2 [shape = 'u8[512]{0}', space=vmem, size = 0x400, scoped, tag = 'input window, operand 0, single buffered']
    #allocation3 [shape = 's32[1]{0}', space=sflag, size = 0x4, scoped, tag = 'scoped memory for tpu_custom_call.1']
    #allocation4 [shape = 's32[1]{0}', space=sflag, size = 0x4, scoped, tag = 'scoped memory for tpu_custom_call.1']
    #allocation5 [shape = 'u8[512]{0}', space=vmem, size = 0x400, scoped, tag = 'output window, operand 0, single buffered']
    %6 = vsyncpa [#allocation3], 0
    %7 = vsyncpa [#allocation4], 0
    // Predicated region
    $region2: #{tpu_custom_call.1} parent=1 // pred_check
      _
    $region3: #{tpu_custom_call.1} parent=1 // pred_check_branch
      %9 = sbr.rel (0) target = $region5
    $region4: #{tpu_custom_call.1} parent=1 // pred_region
      %s11 = ssub.s32 16, 16
      %12 = vsyncadd [#allocation3], %s11
      %s14 = sshll.u32 [#allocation2], 4
      %s15 = int_to_ptr.vmem [resolvable:$true] %s14
      %17 = dma.hbm_to_vmem [thread:$0]  %s0, 16, %s15, [#allocation3]
    $region5: #{tpu_custom_call.1} parent=1 // pred_fallthru
      _
    // Predicated region
    $region6: #{tpu_custom_call.1} parent=1 // pred_check
      _
    $region7: #{tpu_custom_call.1} parent=1 // pred_check_branch
      %19 = sbr.rel (0) target = $region9
    $region8: #{tpu_custom_call.1} parent=1 // pred_region
      %20 = dma.done [#allocation3], 16
    $region9: #{tpu_custom_call.1} parent=1 // pred_fallthru
      _
    %v21 = vld [vmem:[#allocation2] sm:$0x1]
    %v22 = vmul.f32 %v21, 0.62831855
    %v23 = vand.u32 2147483647, %v22
    %vm24 = vcmp.le.f32.partialorder %v23, 0.7853982
    %vm25 = vcmp.lt.s32.totalorder %v22, 0
    %v26 = vand.u32 %v22, 2139095040
    %v27 = vshrl.u32 %v26, 23
    %v28 = vsub.s32 %v27, 127
    %v29 = vand.u32 2147483647, %v22
    %v30 = vand.u32 %v29, 8388607
    %v31 = vor.u32 %v30, 8388608
    %v32 = vsub.s32 0, %v31
    %v33 = vadd.s32 %v28, 1
    %vm34 = vcmp.gt.s32.totalorder %v33, 0
    %v35 = vsel %vm34, %v33, 0
    %v36 = vshrl.u32 %v35, 5
    %v37 = vand.u32 %v35, 31
    %v38 = vsub.s32 32, %v37
    %v39 = vshrl.u32 683565275, %v38
    %v40 = vshll.u32 683565275, %v37
    %v41 = vshrl.u32 2475754826, %v38
    %v42 = vor.u32 %v40, %v41
    %v43 = vshll.u32 2475754826, %v37
    %v44 = vshrl.u32 2131351028, %v38
    %v45 = vor.u32 %v43, %v44
    %v46 = vshll.u32 2131351028, %v37
    %v47 = vshrl.u32 2102212464, %v38
    %v48 = vor.u32 %v46, %v47
    %v49 = vshll.u32 2102212464, %v37
    %v50 = vshrl.u32 920167782, %v38
    %v51 = vor.u32 %v49, %v50
    %v52 = vshll.u32 920167782, %v37
    %v53 = vshrl.u32 1326507024, %v38
    %v54 = vor.u32 %v52, %v53
    %vm55 = vcmp.lt.s32.totalorder %v36, 1
    %vm56 = vcmp.lt.s32.totalorder %v36, 2
    %vm57 = vcmp.lt.s32.totalorder %v36, 3
    %vm58 = vcmp.lt.s32.totalorder %v36, 4
    %v59 = vsel %vm55, %v39, %v42
    %v60 = vsel %vm58, %v48, 2102212464
    %v61 = vsel %vm57, %v45, %v60
    %v62 = vsel %vm56, %v59, %v61
    %v63 = vsel %vm55, %v42, %v45
    %v64 = vsel %vm58, %v51, 920167782
    %v65 = vsel %vm57, %v48, %v64
    %v66 = vsel %vm56, %v63, %v65
    %v67 = vsel %vm55, %v45, %v48
    %v68 = vsel %vm58, %v54, 1326507024
    %v69 = vsel %vm57, %v51, %v68
    %v70 = vsel %vm56, %v67, %v69
    %v71 = vshll.u32 %v31, 8
    %v72 = vmul.u32.u64.compose %v71, %v70
    %v73 = vextract.low.u32 %v72
    %v74 = vextract.high.u32 %v72
    %v75 = vmul.u32.u64.compose %v71, %v66
    %v76 = vextract.low.u32 %v75
    %v77 = vextract.high.u32 %v75
    %v78 = vmul.u32 %v71, %v62
    %v79 = vadd.s32 %v74, %v76
    %vm80 = vc.u32 %v74, %v76
    %v81 = vadd.s32 %v77, 1
    %v82 = vsel %vm80, %v81, %v77
    %v83 = vadd.s32 %v78, %v82
    %v84 = vadd.s32 %v83, 536870912
    %v85 = vshrl.u32 %v84, 30
    %v86 = vshll.u32 %v85, 30
    %v87 = vsub.s32 %v83, %v86
    %vm88 = vcmp.lt.s32.totalorder %v87, 0
    %v89 = vsub.s32 0, %v87
    %v90 = vsel %vm88, %v89, %v87
    %v91 = vclz %v90
    %v92 = vsub.s32 %v91, 2
    %vm93 = vcmp.gt.s32.totalorder 0, %v92
    %v94 = vsel %vm93, 0, %v92
    %v95 = vsub.s32 32, %v94
    %v96 = vshll.u32 %v87, %v94
    %v97 = vshrl.u32 %v79, %v95
    %v98 = vor.u32 %v96, %v97
    %v99 = vsub.s32 4294967266, %v94
    %v100 = vadd.s32 %v99, 127
    %v101 = vshll.u32 %v100, 23
    %v102 = vor.u32 4788187, %v101
    %v103 = vand.u32 2147483647, %v102
    %v105 = vcvt.s32.f32 %v98
    %v106 = vmul.f32 %v105, %v103
    %v107 = vxor.u32 %v106, 2147483648
    %v108 = vsel %vm25, %v107, %v106
    %v109 = vsub.s32 4, %v85
    %v110 = vsel %vm25, %v109, %v85
    %v111 = vsel %vm24, %v22, %v108
    %v112 = vsel %vm24, 0, %v110
    %v113 = vcosq.f32.pop %v111
    %v114 = vsinq.f32.pop %v111
    %vm115 = vweird.f32 %v22
    %v116 = vand.u32 %v112, 3
    %vm117 = vcmp.lt.s32.totalorder %v116, 2
    %vm118 = vcmp.eq.s32.totalorder %v116, 0
    %v119 = vxor.u32 %v114, 2147483648
    %v120 = vsel %vm118, %v113, %v119
    %vm121 = vcmp.eq.s32.totalorder %v116, 2
    %v122 = vxor.u32 %v113, 2147483648
    %v123 = vsel %vm121, %v122, %v114
    %v124 = vsel %vm117, %v120, %v123
    %v125 = vsel %vm115, nan, %v124
    %v126 = vadd.f32 %v125, 1.0
    %v127 = vmul.f32 %v126, 0.5
    %vm128 = vcmp.lt.f32.partialorder %v21, 5.0
    %v129 = vsel %vm128, 1, 0
    %v130 = vcvt.s32.f32 %v129
    %v131 = vmul.f32 %v127, %v130
    %132 = vst [vmem:[#allocation5] sm:$0x1] %v131
    // Predicated region
    $region10: #{tpu_custom_call.1} parent=1 // pred_check
      _
    $region11: #{tpu_custom_call.1} parent=1 // pred_check_branch
      %134 = sbr.rel (0) target = $region13
    $region12: #{tpu_custom_call.1} parent=1 // pred_region
      %s136 = ssub.s32 16, 16
      %137 = vsyncadd [#allocation4], %s136
      %s139 = sshll.u32 [#allocation5], 4
      %s140 = int_to_ptr.vmem [resolvable:$true] %s139
      %142 = dma.vmem_to_hbm [thread:$0]  %s140, 16, %s1, [#allocation4]
    $region13: #{tpu_custom_call.1} parent=1 // pred_fallthru
      _
    // Predicated region
    $region14: #{tpu_custom_call.1} parent=1 // pred_check
      _
    $region15: #{tpu_custom_call.1} parent=1 // pred_check_branch
      %144 = sbr.rel (0) target = $region17
    $region16: #{tpu_custom_call.1} parent=1 // pred_region
      %145 = dma.done [#allocation4], 16
    $region17: #{tpu_custom_call.1} parent=1 // pred_fallthru
      _
    %146 = vsyncpa [#allocation3], 1
    %147 = vsyncpa [#allocation4], 1

</llo_original>
